<compile_context>
chip_gen: v5e
topology: v5e:2x2
jax: 0.10.0
libtpu: 0.0.40
codegen_flags: <defaults>
</compile_context>

<pallas_src>
import jax
import jax.numpy as jnp
from jax.experimental import pallas as pl
from jax.experimental.pallas import tpu as pltpu

RBF_SIZE = 10
FEATURES_SIZE = 100
NUM_ACTIONS = 4
H_AGENT = 81
H_GOAL = 64
H_CONCAT = 256
F_PAD = 128                     # features padded to one full lane block
SF_PAD = NUM_ACTIONS * F_PAD    # 512
_MAX_TILE_B = 512               # batch tile cap (still only a few MB of VMEM)


def _usf_kernel(
    agent_rbf_ref, goal_rbf_ref, env_w_ref,
    w1a_ref, b1a_ref, w1g_ref, b1g_ref,
    wa_ref, ba_ref, wfg_ref,
    wc2_ref, bc2_ref,
    q_ref, sf_ref, feat_ref,
):
    bf16 = jnp.bfloat16

    # --- branch hiddens: Linear(10->81)+ReLU  /  Linear(10->64)+ReLU ---
    h_a = jnp.maximum(
        jnp.dot(agent_rbf_ref[...].astype(bf16), w1a_ref[...],
                preferred_element_type=jnp.float32) + b1a_ref[...], 0.0)
    h_g = jnp.maximum(
        jnp.dot(goal_rbf_ref[...].astype(bf16), w1g_ref[...],
                preferred_element_type=jnp.float32) + b1g_ref[...], 0.0)

    # --- merged agent matmul: cols [0:128) = padded `features` output,
    #     cols [128:384) = agent contribution (w2a @ wc1a folded) to the
    #     concat-layer pre-activation.  Split is 128-lane aligned. ---
    a_out = jnp.dot(h_a.astype(bf16), wa_ref[...],
                    preferred_element_type=jnp.float32) + ba_ref[...]
    feat_ref[...] = a_out[:, :F_PAD]

    # --- folded concat layer: ReLU(agent-fold + goal-fold + folded bias) ---
    h_c = jnp.maximum(
        a_out[:, F_PAD:]
        + jnp.dot(h_g.astype(bf16), wfg_ref[...],
                  preferred_element_type=jnp.float32), 0.0)

    # --- Linear(256 -> 4*128) successor features (lane-dense store) ---
    sf_flat = jnp.dot(h_c.astype(bf16), wc2_ref[...],
                      preferred_element_type=jnp.float32) + bc2_ref[...]
    sf_ref[...] = sf_flat

    # --- fused q epilogue: single reduce + single store.
    #     Pad lanes of sf and env_w are exactly zero, so the 128-lane sum
    #     equals the 100-feature sum. ---
    sf3 = sf_flat.reshape(sf_flat.shape[0], NUM_ACTIONS, F_PAD)
    q_ref[...] = jnp.sum(sf3 * env_w_ref[...][:, None, :], axis=-1)


def init_params(key):
    """Raw parameters, (in_features, out_features) layout (PyTorch Linear init)."""
    def linear(k, fan_in, fan_out):
        kw, kb = jax.random.split(k)
        bound = 1.0 / jnp.sqrt(fan_in)
        w = jax.random.uniform(kw, (fan_in, fan_out), jnp.float32, -bound, bound)
        b = jax.random.uniform(kb, (1, fan_out), jnp.float32, -bound, bound)
        return w, b

    keys = jax.random.split(key, 6)
    w1a, b1a = linear(keys[0], RBF_SIZE, H_AGENT)
    w2a, b2a = linear(keys[1], H_AGENT, FEATURES_SIZE)
    w1g, b1g = linear(keys[2], RBF_SIZE, H_GOAL)
    w2g, b2g = linear(keys[3], H_GOAL, FEATURES_SIZE)
    wc1, bc1 = linear(keys[4], 2 * FEATURES_SIZE, H_CONCAT)
    wc2, bc2 = linear(keys[5], H_CONCAT, NUM_ACTIONS * FEATURES_SIZE)
    return dict(w1a=w1a, b1a=b1a, w2a=w2a, b2a=b2a,
                w1g=w1g, b1g=b1g, w2g=w2g, b2g=b2g,
                wc1=wc1, bc1=bc1, wc2=wc2, bc2=bc2)


def _pad_cols(x, n):
    return jnp.pad(x, ((0, 0), (0, n - x.shape[1])))


def pack_params(p, weight_dtype=jnp.bfloat16):
    """Fold the affine chain into the concat layer, pad feature dims to 128
    lanes (pad columns are exactly zero), merge the two agent-branch output
    matrices and cast matmul weights to `weight_dtype` (biases stay f32)."""
    wc1a = p["wc1"][:FEATURES_SIZE, :]
    wc1g = p["wc1"][FEATURES_SIZE:, :]
    wfold_a = p["w2a"] @ wc1a                                 # (81, 256)
    wfold_g = p["w2g"] @ wc1g                                 # (64, 256)
    b_fold = p["b2a"] @ wc1a + p["b2g"] @ wc1g + p["bc1"]     # (1, 256)

    # merged agent weight: [w2a padded to 128 | wfold_a]  -> (81, 384)
    wa_merged = jnp.concatenate([_pad_cols(p["w2a"], F_PAD), wfold_a], axis=1)
    ba_merged = jnp.concatenate([_pad_cols(p["b2a"], F_PAD), b_fold], axis=1)

    wc2_pad = jnp.concatenate(
        [_pad_cols(p["wc2"][:, a * FEATURES_SIZE:(a + 1) * FEATURES_SIZE], F_PAD)
         for a in range(NUM_ACTIONS)], axis=1)                # (256, 512)
    bc2_pad = jnp.concatenate(
        [_pad_cols(p["bc2"][:, a * FEATURES_SIZE:(a + 1) * FEATURES_SIZE], F_PAD)
         for a in range(NUM_ACTIONS)], axis=1)                # (1, 512)

    return (p["w1a"].astype(weight_dtype), p["b1a"],
            p["w1g"].astype(weight_dtype), p["b1g"],
            wa_merged.astype(weight_dtype), ba_merged,
            wfold_g.astype(weight_dtype),
            wc2_pad.astype(weight_dtype), bc2_pad)


def _cdiv(a, b):
    return -(-a // b)


def _round_up(x, m):
    return _cdiv(x, m) * m


def _choose_tiling(batch):
    """tile_b and padded batch.  >=2 grid steps once the batch is big enough
    (so the 'parallel' axis shards across both v7x TensorCores), tiles capped
    at _MAX_TILE_B, and tile_b derived from cdiv so awkward batch sizes never
    near-double the padded work."""
    if batch <= 128:
        n_tiles = 1
    else:
        n_tiles = max(2, _cdiv(batch, _MAX_TILE_B))
    tile_b = _round_up(_cdiv(batch, n_tiles), 8)
    return tile_b, n_tiles * tile_b


@jax.jit
def usf_forward(agent_position_rbf, policy_goal_position_rbf, env_goal_weights,
                kernel_params):
    """Fast path.  Returns (q (B,4), sf_padded (B,4,128), env_goal_weights,
    features_padded (B,128)).  Pad lanes [100:128) are exactly zero; slice
    lazily at the point of use (usf_forward_module does it for you)."""
    batch = agent_position_rbf.shape[0]
    tile_b, padded_b = _choose_tiling(batch)
    grid = (padded_b // tile_b,)

    def pad_batch(x):
        return jnp.pad(x, ((0, padded_b - batch), (0, 0)))

    agent_p = pad_batch(agent_position_rbf)
    goal_p = pad_batch(policy_goal_position_rbf)
    envw_p = pad_batch(_pad_cols(env_goal_weights, F_PAD))

    def act_spec(n):
        return pl.BlockSpec((tile_b, n), lambda i: (i, 0))

    def full_spec(w):
        # Constant index_map -> weight block stays VMEM-resident across tiles.
        # TODO(synk): pipeline_mode=pl.Buffered(1) would halve the (already
        # tiny, ~0.4 MB bf16) weight VMEM footprint on v7x if tile_b is ever
        # pushed to 1-2K; deferred since it is irrelevant at this size.
        return pl.BlockSpec(w.shape, lambda i: (0, 0))

    in_specs = [act_spec(RBF_SIZE), act_spec(RBF_SIZE), act_spec(F_PAD)]
    in_specs += [full_spec(w) for w in kernel_params]

    q, sf_pad, feat_pad = pl.pallas_call(
        _usf_kernel,
        out_shape=(
            jax.ShapeDtypeStruct((padded_b, NUM_ACTIONS), jnp.float32),
            jax.ShapeDtypeStruct((padded_b, SF_PAD), jnp.float32),
            jax.ShapeDtypeStruct((padded_b, F_PAD), jnp.float32),
        ),
        grid=grid,
        in_specs=in_specs,
        out_specs=(
            pl.BlockSpec((tile_b, NUM_ACTIONS), lambda i: (i, 0)),
            pl.BlockSpec((tile_b, SF_PAD), lambda i: (i, 0)),
            pl.BlockSpec((tile_b, F_PAD), lambda i: (i, 0)),
        ),
        compiler_params=pltpu.CompilerParams(
            dimension_semantics=("parallel",)),
    )(agent_p, goal_p, envw_p, *kernel_params)

    q = q[:batch]
    sf = sf_pad[:batch].reshape(batch, NUM_ACTIONS, F_PAD)   # reshape is free
    features = feat_pad[:batch]
    return q, sf, env_goal_weights, features


def usf_forward_module(agent_position_rbf, policy_goal_position_rbf,
                       env_goal_weights, kernel_params):
    """Exact PyTorch-module shapes: (B,4), (B,4,100), (B,100), (B,100)."""
    q, sf_pad, w, feat_pad = usf_forward(
        agent_position_rbf, policy_goal_position_rbf, env_goal_weights,
        kernel_params)
    return q, sf_pad[:, :, :FEATURES_SIZE], w, feat_pad[:, :FEATURES_SIZE]


def usf_forward_ref(agent_rbf, goal_rbf, env_w, p):
    """Pure-JAX f32 reference mirroring the PyTorch forward (unfolded, unpadded)."""
    feats = jnp.maximum(agent_rbf @ p["w1a"] + p["b1a"], 0.0) @ p["w2a"] + p["b2a"]
    gfeat = jnp.maximum(goal_rbf @ p["w1g"] + p["b1g"], 0.0) @ p["w2g"] + p["b2g"]
    joined = jnp.concatenate([feats, gfeat], axis=1)
    sf = jnp.maximum(joined @ p["wc1"] + p["bc1"], 0.0) @ p["wc2"] + p["bc2"]
    B = sf.shape[0]
    sf = sf.reshape(B, NUM_ACTIONS, FEATURES_SIZE)
    q = jnp.sum(sf * env_w[:, None, :], axis=2)
    return q, sf, env_w, feats


if __name__ == "__main__":
    key = jax.random.PRNGKey(0)
    k_in, k_goal, k_w, k_params = jax.random.split(key, 4)

    batch = 8
    agent_position_rbf = jax.random.normal(k_in, (batch, RBF_SIZE), jnp.float32)
    policy_goal_position_rbf = jax.random.normal(k_goal, (batch, RBF_SIZE), jnp.float32)
    env_goal_weights = jax.random.normal(k_w, (batch, FEATURES_SIZE), jnp.float32)

    raw_params = init_params(k_params)
    kernel_params = pack_params(raw_params)

    q, sf, w_out, features = usf_forward_module(
        agent_position_rbf, policy_goal_position_rbf, env_goal_weights,
        kernel_params)
    jax.block_until_ready((q, sf, w_out, features))

    q_r, sf_r, w_r, feat_r = usf_forward_ref(
        agent_position_rbf, policy_goal_position_rbf, env_goal_weights, raw_params)

    assert q.shape == (batch, NUM_ACTIONS)
    assert sf.shape == (batch, NUM_ACTIONS, FEATURES_SIZE)
    assert features.shape == (batch, FEATURES_SIZE)
    # bf16 MXU operands + the folded/merged affine chain round weights and
    # activations to bf16 and reassociate f32 sums -> loose tolerances vs the
    # pure-f32 reference.
    assert jnp.allclose(features, feat_r, atol=5e-2, rtol=5e-2)
    assert jnp.allclose(sf, sf_r, atol=5e-2, rtol=5e-2)
    assert jnp.allclose(q, q_r, atol=1e-1, rtol=5e-2)
    assert jnp.array_equal(w_out, env_goal_weights)

    print("KERNEL_OK")
</pallas_src>

<mosaic_0001>
module attributes {stable_mosaic.version = 11 : i64} {
  func.func @_usf_kernel(%arg0: i32, %arg1: memref<8x10xf32, #tpu.memory_space<vmem>>, %arg2: memref<8x10xf32, #tpu.memory_space<vmem>>, %arg3: memref<8x128xf32, #tpu.memory_space<vmem>>, %arg4: memref<10x81xbf16, #tpu.memory_space<vmem>>, %arg5: memref<1x81xf32, #tpu.memory_space<vmem>>, %arg6: memref<10x64xbf16, #tpu.memory_space<vmem>>, %arg7: memref<1x64xf32, #tpu.memory_space<vmem>>, %arg8: memref<81x384xbf16, #tpu.memory_space<vmem>>, %arg9: memref<1x384xf32, #tpu.memory_space<vmem>>, %arg10: memref<64x256xbf16, #tpu.memory_space<vmem>>, %arg11: memref<256x512xbf16, #tpu.memory_space<vmem>>, %arg12: memref<1x512xf32, #tpu.memory_space<vmem>>, %arg13: memref<8x4xf32, #tpu.memory_space<vmem>>, %arg14: memref<8x512xf32, #tpu.memory_space<vmem>>, %arg15: memref<8x128xf32, #tpu.memory_space<vmem>>) attributes {dimension_semantics = [#tpu.dimension_semantics<parallel>], iteration_bounds = array<i64: 1>, scalar_prefetch = 0 : i64, scratch_operands = 0 : i64, tpu.core_type = #tpu.core_type<tc>, window_params = [{transform_indices = @transform_0, window_bounds = array<i64: 8, 10>}, {transform_indices = @transform_1, window_bounds = array<i64: 8, 10>}, {transform_indices = @transform_2, window_bounds = array<i64: 8, 128>}, {pipeline_mode = #tpu.pipeline_mode<synchronous>, transform_indices = @transform_3, window_bounds = array<i64: 10, 81>}, {pipeline_mode = #tpu.pipeline_mode<synchronous>, transform_indices = @transform_4, window_bounds = array<i64: 1, 81>}, {pipeline_mode = #tpu.pipeline_mode<synchronous>, transform_indices = @transform_5, window_bounds = array<i64: 10, 64>}, {pipeline_mode = #tpu.pipeline_mode<synchronous>, transform_indices = @transform_6, window_bounds = array<i64: 1, 64>}, {pipeline_mode = #tpu.pipeline_mode<synchronous>, transform_indices = @transform_7, window_bounds = array<i64: 81, 384>}, {pipeline_mode = #tpu.pipeline_mode<synchronous>, transform_indices = @transform_8, window_bounds = array<i64: 1, 384>}, {pipeline_mode = #tpu.pipeline_mode<synchronous>, transform_indices = @transform_9, window_bounds = array<i64: 64, 256>}, {pipeline_mode = #tpu.pipeline_mode<synchronous>, transform_indices = @transform_10, window_bounds = array<i64: 256, 512>}, {pipeline_mode = #tpu.pipeline_mode<synchronous>, transform_indices = @transform_11, window_bounds = array<i64: 1, 512>}, {transform_indices = @transform_12, window_bounds = array<i64: 8, 4>}, {transform_indices = @transform_13, window_bounds = array<i64: 8, 512>}, {transform_indices = @transform_14, window_bounds = array<i64: 8, 128>}]} {
    %c0 = arith.constant 0 : index
    %c0_0 = arith.constant 0 : index
    %0 = vector.load %arg1[%c0, %c0_0] : memref<8x10xf32, #tpu.memory_space<vmem>>, vector<8x10xf32>
    %1 = arith.truncf %0 : vector<8x10xf32> to vector<8x10xbf16>
    %c0_1 = arith.constant 0 : index
    %c0_2 = arith.constant 0 : index
    %2 = vector.load %arg4[%c0_1, %c0_2] : memref<10x81xbf16, #tpu.memory_space<vmem>>, vector<10x81xbf16>
    %cst = arith.constant dense<0.000000e+00> : vector<8x81xf32>
    %3 = tpu.matmul %1, %2, %cst {dimension_numbers = #tpu.dot_dimension_numbers<[1], [0], [0], [1], [0, 0, 1, 1], [], []>} : vector<8x10xbf16>, vector<10x81xbf16>, vector<8x81xf32> -> vector<8x81xf32>
    %c0_3 = arith.constant 0 : index
    %c0_4 = arith.constant 0 : index
    %4 = vector.load %arg5[%c0_3, %c0_4] : memref<1x81xf32, #tpu.memory_space<vmem>>, vector<1x81xf32>
    %5 = vector.broadcast %4 : vector<1x81xf32> to vector<8x81xf32>
    %6 = arith.addf %3, %5 : vector<8x81xf32>
    %cst_5 = arith.constant 0.000000e+00 : f32
    %7 = vector.broadcast %cst_5 : f32 to vector<8x81xf32>
    %8 = arith.maximumf %6, %7 : vector<8x81xf32>
    %c0_6 = arith.constant 0 : index
    %c0_7 = arith.constant 0 : index
    %9 = vector.load %arg2[%c0_6, %c0_7] : memref<8x10xf32, #tpu.memory_space<vmem>>, vector<8x10xf32>
    %10 = arith.truncf %9 : vector<8x10xf32> to vector<8x10xbf16>
    %c0_8 = arith.constant 0 : index
    %c0_9 = arith.constant 0 : index
    %11 = vector.load %arg6[%c0_8, %c0_9] : memref<10x64xbf16, #tpu.memory_space<vmem>>, vector<10x64xbf16>
    %cst_10 = arith.constant dense<0.000000e+00> : vector<8x64xf32>
    %12 = tpu.matmul %10, %11, %cst_10 {dimension_numbers = #tpu.dot_dimension_numbers<[1], [0], [0], [1], [0, 0, 1, 1], [], []>} : vector<8x10xbf16>, vector<10x64xbf16>, vector<8x64xf32> -> vector<8x64xf32>
    %c0_11 = arith.constant 0 : index
    %c0_12 = arith.constant 0 : index
    %13 = vector.load %arg7[%c0_11, %c0_12] : memref<1x64xf32, #tpu.memory_space<vmem>>, vector<1x64xf32>
    %14 = vector.broadcast %13 : vector<1x64xf32> to vector<8x64xf32>
    %15 = arith.addf %12, %14 : vector<8x64xf32>
    %cst_13 = arith.constant 0.000000e+00 : f32
    %16 = vector.broadcast %cst_13 : f32 to vector<8x64xf32>
    %17 = arith.maximumf %15, %16 : vector<8x64xf32>
    %18 = arith.truncf %8 : vector<8x81xf32> to vector<8x81xbf16>
    %c0_14 = arith.constant 0 : index
    %c0_15 = arith.constant 0 : index
    %19 = vector.load %arg8[%c0_14, %c0_15] : memref<81x384xbf16, #tpu.memory_space<vmem>>, vector<81x384xbf16>
    %cst_16 = arith.constant dense<0.000000e+00> : vector<8x384xf32>
    %20 = tpu.matmul %18, %19, %cst_16 {dimension_numbers = #tpu.dot_dimension_numbers<[1], [0], [0], [1], [0, 0, 1, 1], [], []>} : vector<8x81xbf16>, vector<81x384xbf16>, vector<8x384xf32> -> vector<8x384xf32>
    %c0_17 = arith.constant 0 : index
    %c0_18 = arith.constant 0 : index
    %21 = vector.load %arg9[%c0_17, %c0_18] : memref<1x384xf32, #tpu.memory_space<vmem>>, vector<1x384xf32>
    %22 = vector.broadcast %21 : vector<1x384xf32> to vector<8x384xf32>
    %23 = arith.addf %20, %22 : vector<8x384xf32>
    %24 = vector.extract_strided_slice %23 {offsets = [0, 0], sizes = [8, 128], strides = [1, 1]} : vector<8x384xf32> to vector<8x128xf32>
    %c0_19 = arith.constant 0 : index
    %c0_20 = arith.constant 0 : index
    %25 = vector.load %arg15[%c0_19, %c0_20] : memref<8x128xf32, #tpu.memory_space<vmem>>, vector<8x128xf32>
    tpu.vector_store %arg15[%c0_19, %c0_20], %24 {strides = array<i32>} : memref<8x128xf32, #tpu.memory_space<vmem>>, vector<8x128xf32>,
    %26 = vector.extract_strided_slice %23 {offsets = [0, 128], sizes = [8, 256], strides = [1, 1]} : vector<8x384xf32> to vector<8x256xf32>
    %27 = arith.truncf %17 : vector<8x64xf32> to vector<8x64xbf16>
    %c0_21 = arith.constant 0 : index
    %c0_22 = arith.constant 0 : index
    %28 = vector.load %arg10[%c0_21, %c0_22] : memref<64x256xbf16, #tpu.memory_space<vmem>>, vector<64x256xbf16>
    %cst_23 = arith.constant dense<0.000000e+00> : vector<8x256xf32>
    %29 = tpu.matmul %27, %28, %cst_23 {dimension_numbers = #tpu.dot_dimension_numbers<[1], [0], [0], [1], [0, 0, 1, 1], [], []>} : vector<8x64xbf16>, vector<64x256xbf16>, vector<8x256xf32> -> vector<8x256xf32>
    %30 = arith.addf %26, %29 : vector<8x256xf32>
    %cst_24 = arith.constant 0.000000e+00 : f32
    %31 = vector.broadcast %cst_24 : f32 to vector<8x256xf32>
    %32 = arith.maximumf %30, %31 : vector<8x256xf32>
    %33 = arith.truncf %32 : vector<8x256xf32> to vector<8x256xbf16>
    %c0_25 = arith.constant 0 : index
    %c0_26 = arith.constant 0 : index
    %34 = vector.load %arg11[%c0_25, %c0_26] : memref<256x512xbf16, #tpu.memory_space<vmem>>, vector<256x512xbf16>
    %cst_27 = arith.constant dense<0.000000e+00> : vector<8x512xf32>
    %35 = tpu.matmul %33, %34, %cst_27 {dimension_numbers = #tpu.dot_dimension_numbers<[1], [0], [0], [1], [0, 0, 1, 1], [], []>} : vector<8x256xbf16>, vector<256x512xbf16>, vector<8x512xf32> -> vector<8x512xf32>
    %c0_28 = arith.constant 0 : index
    %c0_29 = arith.constant 0 : index
    %36 = vector.load %arg12[%c0_28, %c0_29] : memref<1x512xf32, #tpu.memory_space<vmem>>, vector<1x512xf32>
    %37 = vector.broadcast %36 : vector<1x512xf32> to vector<8x512xf32>
    %38 = arith.addf %35, %37 : vector<8x512xf32>
    %c0_30 = arith.constant 0 : index
    %c0_31 = arith.constant 0 : index
    %39 = vector.load %arg14[%c0_30, %c0_31] : memref<8x512xf32, #tpu.memory_space<vmem>>, vector<8x512xf32>
    tpu.vector_store %arg14[%c0_30, %c0_31], %38 {strides = array<i32>} : memref<8x512xf32, #tpu.memory_space<vmem>>, vector<8x512xf32>,
    %40 = vector.shape_cast %38 : vector<8x512xf32> to vector<8x4x128xf32>
    %c0_32 = arith.constant 0 : index
    %c0_33 = arith.constant 0 : index
    %41 = vector.load %arg3[%c0_32, %c0_33] : memref<8x128xf32, #tpu.memory_space<vmem>>, vector<8x128xf32>
    %42 = vector.shape_cast %41 : vector<8x128xf32> to vector<8x1x128xf32>
    %43 = vector.broadcast %42 : vector<8x1x128xf32> to vector<8x4x128xf32>
    %44 = arith.mulf %40, %43 : vector<8x4x128xf32>
    %cst_34 = arith.constant dense<0.000000e+00> : vector<8x4xf32>
    %45 = vector.multi_reduction <add>, %44, %cst_34 [2] : vector<8x4x128xf32> to vector<8x4xf32>
    %c0_35 = arith.constant 0 : index
    %c0_36 = arith.constant 0 : index
    %46 = vector.load %arg13[%c0_35, %c0_36] : memref<8x4xf32, #tpu.memory_space<vmem>>, vector<8x4xf32>
    tpu.vector_store %arg13[%c0_35, %c0_36], %45 {strides = array<i32>} : memref<8x4xf32, #tpu.memory_space<vmem>>, vector<8x4xf32>,
    return
  }
  func.func @transform_0(%arg0: i32) -> (i32, i32) {
    %c0_i32 = arith.constant 0 : i32
    %c0_i32_0 = arith.constant 0 : i32
    return %arg0, %c0_i32 : i32, i32
  }
  func.func @transform_1(%arg0: i32) -> (i32, i32) {
    %c0_i32 = arith.constant 0 : i32
    %c0_i32_0 = arith.constant 0 : i32
    return %arg0, %c0_i32 : i32, i32
  }
  func.func @transform_2(%arg0: i32) -> (i32, i32) {
    %c0_i32 = arith.constant 0 : i32
    %c0_i32_0 = arith.constant 0 : i32
    return %arg0, %c0_i32 : i32, i32
  }
  func.func @transform_3(%arg0: i32) -> (i32, i32) {
    %c0_i32 = arith.constant 0 : i32
    %c0_i32_0 = arith.constant 0 : i32
    %c0_i32_1 = arith.constant 0 : i32
    return %c0_i32, %c0_i32_0 : i32, i32
  }
  func.func @transform_4(%arg0: i32) -> (i32, i32) {
    %c0_i32 = arith.constant 0 : i32
    %c0_i32_0 = arith.constant 0 : i32
    %c0_i32_1 = arith.constant 0 : i32
    return %c0_i32, %c0_i32_0 : i32, i32
  }
  func.func @transform_5(%arg0: i32) -> (i32, i32) {
    %c0_i32 = arith.constant 0 : i32
    %c0_i32_0 = arith.constant 0 : i32
    %c0_i32_1 = arith.constant 0 : i32
    return %c0_i32, %c0_i32_0 : i32, i32
  }
  func.func @transform_6(%arg0: i32) -> (i32, i32) {
    %c0_i32 = arith.constant 0 : i32
    %c0_i32_0 = arith.constant 0 : i32
    %c0_i32_1 = arith.constant 0 : i32
    return %c0_i32, %c0_i32_0 : i32, i32
  }
  func.func @transform_7(%arg0: i32) -> (i32, i32) {
    %c0_i32 = arith.constant 0 : i32
    %c0_i32_0 = arith.constant 0 : i32
    %c0_i32_1 = arith.constant 0 : i32
    return %c0_i32, %c0_i32_0 : i32, i32
  }
  func.func @transform_8(%arg0: i32) -> (i32, i32) {
    %c0_i32 = arith.constant 0 : i32
    %c0_i32_0 = arith.constant 0 : i32
    %c0_i32_1 = arith.constant 0 : i32
    return %c0_i32, %c0_i32_0 : i32, i32
  }
  func.func @transform_9(%arg0: i32) -> (i32, i32) {
    %c0_i32 = arith.constant 0 : i32
    %c0_i32_0 = arith.constant 0 : i32
    %c0_i32_1 = arith.constant 0 : i32
    return %c0_i32, %c0_i32_0 : i32, i32
  }
  func.func @transform_10(%arg0: i32) -> (i32, i32) {
    %c0_i32 = arith.constant 0 : i32
    %c0_i32_0 = arith.constant 0 : i32
    %c0_i32_1 = arith.constant 0 : i32
    return %c0_i32, %c0_i32_0 : i32, i32
  }
  func.func @transform_11(%arg0: i32) -> (i32, i32) {
    %c0_i32 = arith.constant 0 : i32
    %c0_i32_0 = arith.constant 0 : i32
    %c0_i32_1 = arith.constant 0 : i32
    return %c0_i32, %c0_i32_0 : i32, i32
  }
  func.func @transform_12(%arg0: i32) -> (i32, i32) {
    %c0_i32 = arith.constant 0 : i32
    %c0_i32_0 = arith.constant 0 : i32
    return %arg0, %c0_i32 : i32, i32
  }
  func.func @transform_13(%arg0: i32) -> (i32, i32) {
    %c0_i32 = arith.constant 0 : i32
    %c0_i32_0 = arith.constant 0 : i32
    return %arg0, %c0_i32 : i32, i32
  }
  func.func @transform_14(%arg0: i32) -> (i32, i32) {
    %c0_i32 = arith.constant 0 : i32
    %c0_i32_0 = arith.constant 0 : i32
    return %arg0, %c0_i32 : i32, i32
  }
}

</mosaic_0001>

<llo_original>
// kernel: usf_forward.1
$region0: #{usf_forward.1}
  #allocation0 [shape = 'u32[]', space=smem, size = 0x4, offset = 0x4, fixed_abs, tag = 'smem constant byte address 0x4 - core index']
  #allocation1 [shape = 'u32[72,128]{1,0:T(1,128)}', space=vmem, size = 0x9000, scoped, tag = 'internal scratch']
  %s0 = inlined_call_operand.vmem [shape: f32[8,10], index: 0, kind: input, shape index: {}]
  %s1 = inlined_call_operand.vmem [shape: f32[8,10], index: 1, kind: input, shape index: {}]
  %s2 = inlined_call_operand.vmem [shape: f32[8,128], index: 2, kind: input, shape index: {}]
  %s3 = inlined_call_operand.hbm [shape: bf16[10,81], index: 3, kind: input, shape index: {}]
  %s4 = inlined_call_operand.vmem [shape: f32[1,81], index: 4, kind: input, shape index: {}]
  %s5 = inlined_call_operand.hbm [shape: bf16[10,64], index: 5, kind: input, shape index: {}]
  %s6 = inlined_call_operand.hbm [shape: f32[1,64], index: 6, kind: input, shape index: {}]
  %s7 = inlined_call_operand.hbm [shape: bf16[81,384], index: 7, kind: input, shape index: {}]
  %s8 = inlined_call_operand.hbm [shape: f32[1,384], index: 8, kind: input, shape index: {}]
  %s9 = inlined_call_operand.hbm [shape: bf16[64,256], index: 9, kind: input, shape index: {}]
  %s10 = inlined_call_operand.hbm [shape: bf16[256,512], index: 10, kind: input, shape index: {}]
  %s11 = inlined_call_operand.hbm [shape: f32[1,512], index: 11, kind: input, shape index: {}]
  %s12 = inlined_call_operand.vmem [shape: f32[8,4], index: 12, kind: output, shape index: {0}]
  %s13 = inlined_call_operand.vmem [shape: f32[8,512], index: 13, kind: output, shape index: {1}]
  %s14 = inlined_call_operand.hbm [shape: f32[8,128], index: 14, kind: output, shape index: {2}]
  %15 = xla_tuple %s12, %s13, %s14
  %s16 = sld [smem:[#allocation0]]
  $region106: #{usf_forward.1} parent=0
    _
  %s18 = ssub.s32 1, %s16
  %s19 = scalar_select 0, %s18, %s16
  $region1: #{usf_forward.1} parent=0
    #allocation2 [shape = 'u8[4096]{0}', space=vmem, size = 0x1000, scoped, tag = 'input window, operand 3, single buffered']
    #allocation3 [shape = 's32[1]{0}', space=sflag, size = 0x4, scoped, tag = 'scoped memory for usf_forward.1']
    #allocation4 [shape = 's32[1]{0}', space=sflag, size = 0x4, scoped, tag = 'scoped memory for usf_forward.1']
    #allocation5 [shape = 'u8[4096]{0}', space=vmem, size = 0x1000, scoped, tag = 'input window, operand 5, single buffered']
    #allocation6 [shape = 's32[1]{0}', space=sflag, size = 0x4, scoped, tag = 'scoped memory for usf_forward.1']
    #allocation7 [shape = 'u8[512]{0}', space=vmem, size = 0x400, scoped, tag = 'input window, operand 6, single buffered']
    #allocation8 [shape = 'u8[67584]{0}', space=vmem, size = 0x10800, scoped, tag = 'input window, operand 7, single buffered']
    #allocation9 [shape = 's32[1]{0}', space=sflag, size = 0x4, scoped, tag = 'scoped memory for usf_forward.1']
    #allocation10 [shape = 'u8[1536]{0}', space=vmem, size = 0x800, scoped, tag = 'input window, operand 8, single buffered']
    #allocation11 [shape = 'u8[32768]{0}', space=vmem, size = 0x8000, scoped, tag = 'input window, operand 9, single buffered']
    #allocation12 [shape = 's32[1]{0}', space=sflag, size = 0x4, scoped, tag = 'scoped memory for usf_forward.1']
    #allocation13 [shape = 'u8[262144]{0}', space=vmem, size = 0x40000, scoped, tag = 'input window, operand 10, single buffered']
    #allocation14 [shape = 'u8[2048]{0}', space=vmem, size = 0x800, scoped, tag = 'input window, operand 11, single buffered']
    #allocation15 [shape = 's32[1]{0}', space=sflag, size = 0x4, scoped, tag = 'scoped memory for usf_forward.1']
    #allocation16 [shape = 'u8[4096]{0}', space=vmem, size = 0x1000, scoped, tag = 'output window, operand 2, single buffered']
    %20 = vsyncpa [#allocation3], 0
    %21 = vsyncpa [#allocation6], 0
    %22 = vsyncpa [#allocation9], 0
    %23 = vsyncpa [#allocation12], 0
    %24 = vsyncpa [#allocation15], 0
    %25 = vsyncpa [#allocation4], 0
    // Predicated region
    $region2: #{usf_forward.1} parent=1 // pred_check
      _
    $region3: #{usf_forward.1} parent=1 // pred_check_branch
      %27 = sbr.rel (0) target = $region5
    $region4: #{usf_forward.1} parent=1 // pred_region
      _
    $region5: #{usf_forward.1} parent=1 // pred_fallthru
      _
    // Predicated region
    $region6: #{usf_forward.1} parent=1 // pred_check
      _
    $region7: #{usf_forward.1} parent=1 // pred_check_branch
      %29 = sbr.rel (0) target = $region9
    $region8: #{usf_forward.1} parent=1 // pred_region
      _
    $region9: #{usf_forward.1} parent=1 // pred_fallthru
      _
    // Predicated region
    $region10: #{usf_forward.1} parent=1 // pred_check
      _
    $region11: #{usf_forward.1} parent=1 // pred_check_branch
      %31 = sbr.rel (0) target = $region13
    $region12: #{usf_forward.1} parent=1 // pred_region
      _
    $region13: #{usf_forward.1} parent=1 // pred_fallthru
      _
    // Predicated region
    $region14: #{usf_forward.1} parent=1 // pred_check
      _
    $region15: #{usf_forward.1} parent=1 // pred_check_branch
      %33 = sbr.rel (0) target = $region17
    $region16: #{usf_forward.1} parent=1 // pred_region
      %35 = vsyncadd [#allocation3], 0
      %s36 = sshll.u32 %s3, 4
      %s37 = int_to_ptr.hbm [resolvable:$true] %s36
      %s38 = sshll.u32 [#allocation2], 4
      %s39 = int_to_ptr.vmem [resolvable:$true] %s38
      %44 = dma.hbm_to_vmem [thread:$0]  %s37, 128, %s39, [#allocation3], 64, 64, 4
    $region17: #{usf_forward.1} parent=1 // pred_fallthru
      _
    // Predicated region
    $region18: #{usf_forward.1} parent=1 // pred_check
      _
    $region19: #{usf_forward.1} parent=1 // pred_check_branch
      %46 = sbr.rel (0) target = $region21
    $region20: #{usf_forward.1} parent=1 // pred_region
      _
    $region21: #{usf_forward.1} parent=1 // pred_fallthru
      _
    // Predicated region
    $region22: #{usf_forward.1} parent=1 // pred_check
      _
    $region23: #{usf_forward.1} parent=1 // pred_check_branch
      %48 = sbr.rel (0) target = $region25
    $region24: #{usf_forward.1} parent=1 // pred_region
      %50 = vsyncadd [#allocation6], 0
      %s51 = sshll.u32 %s5, 4
      %s52 = int_to_ptr.hbm [resolvable:$true] %s51
      %s53 = sshll.u32 [#allocation5], 4
      %s54 = int_to_ptr.vmem [resolvable:$true] %s53
      %59 = dma.hbm_to_vmem [thread:$0]  %s52, 128, %s54, [#allocation6], 64, 64, 4
    $region25: #{usf_forward.1} parent=1 // pred_fallthru
      _
    // Predicated region
    $region26: #{usf_forward.1} parent=1 // pred_check
      _
    $region27: #{usf_forward.1} parent=1 // pred_check_branch
      %61 = sbr.rel (0) target = $region29
    $region28: #{usf_forward.1} parent=1 // pred_region
      %63 = vsyncadd [#allocation6], 0
      %s65 = sshll.u32 %s6, 4
      %s66 = int_to_ptr.hbm [resolvable:$true] %s65
      %s67 = sshll.u32 [#allocation7], 4
      %s68 = int_to_ptr.vmem [resolvable:$true] %s67
      %70 = dma.hbm_to_vmem [thread:$0]  %s66, 16, %s68, [#allocation6]
    $region29: #{usf_forward.1} parent=1 // pred_fallthru
      _
    // Predicated region
    $region30: #{usf_forward.1} parent=1 // pred_check
      _
    $region31: #{usf_forward.1} parent=1 // pred_check_branch
      %72 = sbr.rel (0) target = $region33
    $region32: #{usf_forward.1} parent=1 // pred_region
      %74 = vsyncadd [#allocation9], 0
      %s75 = sshll.u32 %s7, 4
      %s76 = int_to_ptr.hbm [resolvable:$true] %s75
      %s77 = sshll.u32 [#allocation8], 4
      %s78 = int_to_ptr.vmem [resolvable:$true] %s77
      %83 = dma.hbm_to_vmem [thread:$0]  %s76, 2112, %s78, [#allocation9], 192, 192, 12
    $region33: #{usf_forward.1} parent=1 // pred_fallthru
      _
    // Predicated region
    $region34: #{usf_forward.1} parent=1 // pred_check
      _
    $region35: #{usf_forward.1} parent=1 // pred_check_branch
      %85 = sbr.rel (0) target = $region37
    $region36: #{usf_forward.1} parent=1 // pred_region
      %87 = vsyncadd [#allocation9], 0
      %s89 = sshll.u32 %s8, 4
      %s90 = int_to_ptr.hbm [resolvable:$true] %s89
      %s91 = sshll.u32 [#allocation10], 4
      %s92 = int_to_ptr.vmem [resolvable:$true] %s91
      %94 = dma.hbm_to_vmem [thread:$0]  %s90, 48, %s92, [#allocation9]
    $region37: #{usf_forward.1} parent=1 // pred_fallthru
      _
    // Predicated region
    $region38: #{usf_forward.1} parent=1 // pred_check
      _
    $region39: #{usf_forward.1} parent=1 // pred_check_branch
      %96 = sbr.rel (0) target = $region41
    $region40: #{usf_forward.1} parent=1 // pred_region
      %98 = vsyncadd [#allocation12], 0
      %s99 = sshll.u32 %s9, 4
      %s100 = int_to_ptr.hbm [resolvable:$true] %s99
      %s101 = sshll.u32 [#allocation11], 4
      %s102 = int_to_ptr.vmem [resolvable:$true] %s101
      %107 = dma.hbm_to_vmem [thread:$0]  %s100, 1024, %s102, [#allocation12], 128, 128, 8
    $region41: #{usf_forward.1} parent=1 // pred_fallthru
      _
    // Predicated region
    $region42: #{usf_forward.1} parent=1 // pred_check
      _
    $region43: #{usf_forward.1} parent=1 // pred_check_branch
      %109 = sbr.rel (0) target = $region45
    $region44: #{usf_forward.1} parent=1 // pred_region
      %111 = vsyncadd [#allocation12], 0
      %s112 = sshll.u32 %s10, 4
      %s113 = int_to_ptr.hbm [resolvable:$true] %s112
      %s114 = sshll.u32 [#allocation13], 4
      %s115 = int_to_ptr.vmem [resolvable:$true] %s114
      %120 = dma.hbm_to_vmem [thread:$0]  %s113, 8192, %s115, [#allocation12], 256, 256, 16
    $region45: #{usf_forward.1} parent=1 // pred_fallthru
      _
    // Predicated region
    $region46: #{usf_forward.1} parent=1 // pred_check
      _
    $region47: #{usf_forward.1} parent=1 // pred_check_branch
      %122 = sbr.rel (0) target = $region49
    $region48: #{usf_forward.1} parent=1 // pred_region
      %124 = vsyncadd [#allocation15], 0
      %s126 = sshll.u32 %s11, 4
      %s127 = int_to_ptr.hbm [resolvable:$true] %s126
      %s128 = sshll.u32 [#allocation14], 4
      %s129 = int_to_ptr.vmem [resolvable:$true] %s128
      %131 = dma.hbm_to_vmem [thread:$0]  %s127, 64, %s129, [#allocation15]
    $region49: #{usf_forward.1} parent=1 // pred_fallthru
      _
    // Predicated region
    $region50: #{usf_forward.1} parent=1 // pred_check
      _
    $region51: #{usf_forward.1} parent=1 // pred_check_branch
      %133 = sbr.rel (0) target = $region53
    $region52: #{usf_forward.1} parent=1 // pred_region
      %135 = dma.done [#allocation3], 128
    $region53: #{usf_forward.1} parent=1 // pred_fallthru
      _
    // Predicated region
    $region54: #{usf_forward.1} parent=1 // pred_check
      _
    $region55: #{usf_forward.1} parent=1 // pred_check_branch
      %137 = sbr.rel (0) target = $region57
    $region56: #{usf_forward.1} parent=1 // pred_region
      %139 = dma.done [#allocation6], 128
    $region57: #{usf_forward.1} parent=1 // pred_fallthru
      _
    // Predicated region
    $region58: #{usf_forward.1} parent=1 // pred_check
      _
    $region59: #{usf_forward.1} parent=1 // pred_check_branch
      %141 = sbr.rel (0) target = $region61
    $region60: #{usf_forward.1} parent=1 // pred_region
      %143 = dma.done [#allocation6], 16
    $region61: #{usf_forward.1} parent=1 // pred_fallthru
      _
    // Predicated region
    $region62: #{usf_forward.1} parent=1 // pred_check
      _
    $region63: #{usf_forward.1} parent=1 // pred_check_branch
      %145 = sbr.rel (0) target = $region65
    $region64: #{usf_forward.1} parent=1 // pred_region
      %147 = dma.done [#allocation9], 2112
    $region65: #{usf_forward.1} parent=1 // pred_fallthru
      _
    // Predicated region
    $region66: #{usf_forward.1} parent=1 // pred_check
      _
    $region67: #{usf_forward.1} parent=1 // pred_check_branch
      %149 = sbr.rel (0) target = $region69
    $region68: #{usf_forward.1} parent=1 // pred_region
      %151 = dma.done [#allocation9], 48
    $region69: #{usf_forward.1} parent=1 // pred_fallthru
      _
    // Predicated region
    $region70: #{usf_forward.1} parent=1 // pred_check
      _
    $region71: #{usf_forward.1} parent=1 // pred_check_branch
      %153 = sbr.rel (0) target = $region73
    $region72: #{usf_forward.1} parent=1 // pred_region
      %155 = dma.done [#allocation12], 1024
    $region73: #{usf_forward.1} parent=1 // pred_fallthru
      _
    // Predicated region
    $region74: #{usf_forward.1} parent=1 // pred_check
      _
    $region75: #{usf_forward.1} parent=1 // pred_check_branch
      %157 = sbr.rel (0) target = $region77
    $region76: #{usf_forward.1} parent=1 // pred_region
      %159 = dma.done [#allocation12], 8192
    $region77: #{usf_forward.1} parent=1 // pred_fallthru
      _
    // Predicated region
    $region78: #{usf_forward.1} parent=1 // pred_check
      _
    $region79: #{usf_forward.1} parent=1 // pred_check_branch
      %161 = sbr.rel (0) target = $region81
    $region80: #{usf_forward.1} parent=1 // pred_region
      %163 = dma.done [#allocation15], 64
    $region81: #{usf_forward.1} parent=1 // pred_fallthru
      _
    %v165 = vld [vmem:[%s0] sm:$0xff]
    %v166 = vpack.c.bf16 %v165, %v165
    %v167 = vld [vmem:[#allocation2] sm:$0xf]
    %v168 = vld [vmem:[#allocation2 + $0x4] sm:$0x1]
    %v169 = vld [vmem:[%s4] sm:$0x1]
    %v171 = vperm.slane %v169, 0
    %v175 = vunpack.c.l.b16 %v167
    %v176 = vunpack.c.l.b16 %v168
    %v177 = vpack.c.b16 %v176, %v175
    %vm178 = vcmask 80896
    %v180 = vsel %vm178, %v166, 0
    %vm182 = vcmask 1044480
    %v184 = vsel %vm182, %v177, 0
    %186 = vmatpush.bf16.msra.mxu0 0
    %187 = vmatpush.bf16.msra.mxu0 0
    %188 = vmatpush.bf16.msra.mxu0 0
    %189 = vmatpush.bf16.msra.mxu0 0
    %190 = vmatpush.bf16.msra.mxu0 0
    %191 = vmatpush.bf16.msra.mxu0 0
    %192 = vmatpush.bf16.msra.mxu0 0
    %193 = vmatpush.bf16.msra.mxu0 %v184
    %194 = vmatmul.bf16.gmra.mxu0 %v180
    %v195 = vpop.f32.mrf.mxu0
    %v196 = vadd.f32 %v171, %v195
    %v197 = vpop.f32.mrf.mxu0
    %198 = vdwg.mxu0
    %v199 = vmax.f32 %v196, 0.0
    %v200 = vld [vmem:[%s1] sm:$0xff]
    %v201 = vpack.c.bf16 %v200, %v200
    %v202 = vld [vmem:[#allocation5] sm:$0xf]
    %v203 = vld [vmem:[#allocation5 + $0x4] sm:$0x1]
    %v204 = vld [vmem:[#allocation7] sm:$0x1]
    %v206 = vperm.slane %v204, 0
    %v210 = vunpack.c.l.b16 %v202
    %v211 = vunpack.c.l.b16 %v203
    %v212 = vpack.c.b16 %v211, %v210
    %v214 = vsel %vm178, %v201, 0
    %v217 = vsel %vm182, %v212, 0
    %219 = vmatpush.bf16.msra.mxu0 0
    %220 = vmatpush.bf16.msra.mxu0 0
    %221 = vmatpush.bf16.msra.mxu0 0
    %222 = vmatpush.bf16.msra.mxu0 0
    %223 = vmatpush.bf16.msra.mxu0 0
    %224 = vmatpush.bf16.msra.mxu0 0
    %225 = vmatpush.bf16.msra.mxu0 0
    %226 = vmatpush.bf16.msra.mxu0 %v217
    %227 = vmatmul.bf16.gmra.mxu0 %v214
    %v228 = vpop.f32.mrf.mxu0
    %v229 = vadd.f32 %v206, %v228
    %v230 = vpop.f32.mrf.mxu0
    %231 = vdwg.mxu0
    %v232 = vmax.f32 %v229, 0.0
    %v233 = vpack.c.bf16 %v199, %v199
    %v234 = vld [vmem:[#allocation8] sm:$0xff]
    %v235 = vld [vmem:[#allocation8 + $0x8] sm:$0xf]
    %v236 = vld [vmem:[#allocation8 + $0xc] sm:$0xff]
    %v237 = vld [vmem:[#allocation8 + $0x14] sm:$0xf]
    %v238 = vld [vmem:[#allocation8 + $0x18] sm:$0xff]
    %v239 = vld [vmem:[#allocation8 + $0x20] sm:$0xf]
    %v240 = vld [vmem:[#allocation8 + $0x24] sm:$0xff]
    %v241 = vld [vmem:[#allocation8 + $0x2c] sm:$0xf]
    %v242 = vld [vmem:[#allocation8 + $0x30] sm:$0xff]
    %v243 = vld [vmem:[#allocation8 + $0x38] sm:$0xf]
    %v244 = vld [vmem:[#allocation8 + $0x3c] sm:$0xff]
    %v245 = vld [vmem:[#allocation8 + $0x44] sm:$0xf]
    %v246 = vld [vmem:[#allocation8 + $0x48] sm:$0xff]
    %v247 = vld [vmem:[#allocation8 + $0x50] sm:$0xf]
    %v248 = vld [vmem:[#allocation8 + $0x54] sm:$0xff]
    %v249 = vld [vmem:[#allocation8 + $0x5c] sm:$0xf]
    %v250 = vld [vmem:[#allocation8 + $0x60] sm:$0xff]
    %v251 = vld [vmem:[#allocation8 + $0x68] sm:$0xf]
    %v252 = vld [vmem:[#allocation8 + $0x6c] sm:$0xff]
    %v253 = vld [vmem:[#allocation8 + $0x74] sm:$0xf]
    %v254 = vld [vmem:[#allocation8 + $0x78] sm:$0x11]
    %v255 = vld [vmem:[#allocation8 + $0x80] sm:$0x1]
    %v256 = vld [vmem:[#allocation10] sm:$0x7]
    %v258 = vperm.slane %v256, 0
    %v259 = vperm.slane %v256, 1
    %v260 = vperm.slane %v256, 2
    %v286 = vunpack.c.l.b16 %v234
    %v287 = vunpack.c.h.b16 %v234
    %v288 = vunpack.c.l.b16 %v235
    %v289 = vunpack.c.l.b16 %v236
    %v290 = vunpack.c.h.b16 %v236
    %v291 = vunpack.c.l.b16 %v237
    %v292 = vunpack.c.l.b16 %v238
    %v293 = vunpack.c.h.b16 %v238
    %v294 = vunpack.c.l.b16 %v239
    %v295 = vunpack.c.l.b16 %v240
    %v296 = vunpack.c.h.b16 %v240
    %v297 = vunpack.c.l.b16 %v241
    %v298 = vunpack.c.l.b16 %v242
    %v299 = vunpack.c.h.b16 %v242
    %v300 = vunpack.c.l.b16 %v243
    %v301 = vunpack.c.l.b16 %v244
    %v302 = vunpack.c.h.b16 %v244
    %v303 = vunpack.c.l.b16 %v245
    %v304 = vunpack.c.l.b16 %v246
    %v305 = vunpack.c.h.b16 %v246
    %v306 = vunpack.c.l.b16 %v247
    %v307 = vunpack.c.l.b16 %v248
    %v308 = vunpack.c.h.b16 %v248
    %v309 = vunpack.c.l.b16 %v249
    %v310 = vunpack.c.l.b16 %v250
    %v311 = vunpack.c.h.b16 %v250
    %v312 = vunpack.c.l.b16 %v251
    %v313 = vunpack.c.l.b16 %v252
    %v314 = vunpack.c.h.b16 %v252
    %v315 = vunpack.c.l.b16 %v253
    %v316 = vunpack.c.l.b16 %v254
    %v317 = vunpack.c.h.b16 %v254
    %v318 = vunpack.c.l.b16 %v255
    %v319 = vpack.c.b16 %v289, %v286
    %v320 = vpack.c.b16 %v290, %v287
    %v321 = vpack.c.b16 %v291, %v288
    %v322 = vpack.c.b16 %v295, %v292
    %v323 = vpack.c.b16 %v296, %v293
    %v324 = vpack.c.b16 %v297, %v294
    %v325 = vpack.c.b16 %v301, %v298
    %v326 = vpack.c.b16 %v302, %v299
    %v327 = vpack.c.b16 %v303, %v300
    %v328 = vpack.c.b16 %v307, %v304
    %v329 = vpack.c.b16 %v308, %v305
    %v330 = vpack.c.b16 %v309, %v306
    %v331 = vpack.c.b16 %v313, %v310
    %v332 = vpack.c.b16 %v314, %v311
    %v333 = vpack.c.b16 %v315, %v312
    %v334 = vpack.c.b16 %v316, %v316
    %v335 = vpack.c.b16 %v317, %v317
    %v336 = vpack.c.b16 %v318, %v318
    %vm352 = vcmask 662528
    %v354 = vsel %vm352, %v233, 0
    %vm356 = vcmask 1040384
    %v357 = vsel 0, 4294967295, 65535
    %v358 = vsel %vm356, %v357, 0
    %v360 = vand.u32 %v334, %v358
    %v363 = vand.u32 %v335, %v358
    %v366 = vand.u32 %v336, %v358
    %368 = vmatpush.bf16.msra.mxu0 0
    %369 = vmatpush.bf16.msra.mxu0 0
    %370 = vmatpush.bf16.msra.mxu0 %v360
    %371 = vmatpush.bf16.msra.mxu0 %v331
    %372 = vmatpush.bf16.msra.mxu0 %v328
    %373 = vmatpush.bf16.msra.mxu0 %v325
    %374 = vmatpush.bf16.msra.mxu0 %v322
    %375 = vmatpush.bf16.msra.mxu0 %v319
    %376 = vmatmul.bf16.gmra.mxu0 %v354
    %v377 = vpop.f32.mrf.mxu0
    %v378 = vadd.f32 %v258, %v377
    %v379 = vpop.f32.mrf.mxu0
    %380 = vdwg.mxu0
    %381 = vmatpush.bf16.msra.mxu0 0
    %382 = vmatpush.bf16.msra.mxu0 0
    %383 = vmatpush.bf16.msra.mxu0 %v363
    %384 = vmatpush.bf16.msra.mxu0 %v332
    %385 = vmatpush.bf16.msra.mxu0 %v329
    %386 = vmatpush.bf16.msra.mxu0 %v326
    %387 = vmatpush.bf16.msra.mxu0 %v323
    %388 = vmatpush.bf16.msra.mxu0 %v320
    %389 = vmatmul.bf16.gmra.mxu0 %v354
    %v390 = vpop.f32.mrf.mxu0
    %v391 = vadd.f32 %v259, %v390
    %v392 = vpop.f32.mrf.mxu0
    %393 = vdwg.mxu0
    %394 = vmatpush.bf16.msra.mxu0 0
    %395 = vmatpush.bf16.msra.mxu0 0
    %396 = vmatpush.bf16.msra.mxu0 %v366
    %397 = vmatpush.bf16.msra.mxu0 %v333
    %398 = vmatpush.bf16.msra.mxu0 %v330
    %399 = vmatpush.bf16.msra.mxu0 %v327
    %400 = vmatpush.bf16.msra.mxu0 %v324
    %401 = vmatpush.bf16.msra.mxu0 %v321
    %402 = vmatmul.bf16.gmra.mxu0 %v354
    %v403 = vpop.f32.mrf.mxu0
    %v404 = vadd.f32 %v260, %v403
    %v405 = vpop.f32.mrf.mxu0
    %406 = vdwg.mxu0
    %407 = vst [vmem:[#allocation16] sm:$0xff] %v378
    %v408 = vpack.c.bf16 %v232, %v232
    %v409 = vld [vmem:[#allocation11] sm:$0xff]
    %v410 = vld [vmem:[#allocation11 + $0x8] sm:$0xff]
    %v411 = vld [vmem:[#allocation11 + $0x10] sm:$0xff]
    %v412 = vld [vmem:[#allocation11 + $0x18] sm:$0xff]
    %v413 = vld [vmem:[#allocation11 + $0x20] sm:$0xff]
    %v414 = vld [vmem:[#allocation11 + $0x28] sm:$0xff]
    %v415 = vld [vmem:[#allocation11 + $0x30] sm:$0xff]
    %v416 = vld [vmem:[#allocation11 + $0x38] sm:$0xff]
    %v425 = vunpack.c.l.b16 %v409
    %v426 = vunpack.c.h.b16 %v409
    %v427 = vunpack.c.l.b16 %v410
    %v428 = vunpack.c.h.b16 %v410
    %v429 = vunpack.c.l.b16 %v411
    %v430 = vunpack.c.h.b16 %v411
    %v431 = vunpack.c.l.b16 %v412
    %v432 = vunpack.c.h.b16 %v412
    %v433 = vunpack.c.l.b16 %v413
    %v434 = vunpack.c.h.b16 %v413
    %v435 = vunpack.c.l.b16 %v414
    %v436 = vunpack.c.h.b16 %v414
    %v437 = vunpack.c.l.b16 %v415
    %v438 = vunpack.c.h.b16 %v415
    %v439 = vunpack.c.l.b16 %v416
    %v440 = vunpack.c.h.b16 %v416
    %v441 = vpack.c.b16 %v427, %v425
    %v442 = vpack.c.b16 %v428, %v426
    %v443 = vpack.c.b16 %v431, %v429
    %v444 = vpack.c.b16 %v432, %v430
    %v445 = vpack.c.b16 %v435, %v433
    %v446 = vpack.c.b16 %v436, %v434
    %v447 = vpack.c.b16 %v439, %v437
    %v448 = vpack.c.b16 %v440, %v438
    %vm457 = vcmask 523264
    %v459 = vsel %vm457, %v408, 0
    %461 = vmatpush.bf16.msra.mxu0 0
    %462 = vmatpush.bf16.msra.mxu0 0
    %463 = vmatpush.bf16.msra.mxu0 0
    %464 = vmatpush.bf16.msra.mxu0 0
    %465 = vmatpush.bf16.msra.mxu0 %v447
    %466 = vmatpush.bf16.msra.mxu0 %v445
    %467 = vmatpush.bf16.msra.mxu0 %v443
    %468 = vmatpush.bf16.msra.mxu0 %v441
    %469 = vmatmul.bf16.gmra.mxu0 %v459
    %v470 = vpop.f32.mrf.mxu0
    %v471 = vadd.f32 0.0, %v470
    %v472 = vpop.f32.mrf.mxu0
    %473 = vdwg.mxu0
    %474 = vmatpush.bf16.msra.mxu0 0
    %475 = vmatpush.bf16.msra.mxu0 0
    %476 = vmatpush.bf16.msra.mxu0 0
    %477 = vmatpush.bf16.msra.mxu0 0
    %478 = vmatpush.bf16.msra.mxu0 %v448
    %479 = vmatpush.bf16.msra.mxu0 %v446
    %480 = vmatpush.bf16.msra.mxu0 %v444
    %481 = vmatpush.bf16.msra.mxu0 %v442
    %482 = vmatmul.bf16.gmra.mxu0 %v459
    %v483 = vpop.f32.mrf.mxu0
    %v484 = vadd.f32 0.0, %v483
    %v485 = vpop.f32.mrf.mxu0
    %486 = vdwg.mxu0
    %v487 = vadd.f32 %v391, %v471
    %v488 = vadd.f32 %v404, %v484
    %v489 = vmax.f32 %v487, 0.0
    %v490 = vmax.f32 %v488, 0.0
    %v491 = vpack.c.bf16 %v489, %v489
    %v492 = vpack.c.bf16 %v490, %v490
    %v493 = vld [vmem:[#allocation13] sm:$0xff]
    %v494 = vld [vmem:[#allocation13 + $0x8] sm:$0xff]
    %v495 = vld [vmem:[#allocation13 + $0x10] sm:$0xff]
    %v496 = vld [vmem:[#allocation13 + $0x18] sm:$0xff]
    %v497 = vld [vmem:[#allocation13 + $0x20] sm:$0xff]
    %v498 = vld [vmem:[#allocation13 + $0x28] sm:$0xff]
    %v499 = vld [vmem:[#allocation13 + $0x30] sm:$0xff]
    %v500 = vld [vmem:[#allocation13 + $0x38] sm:$0xff]
    %v501 = vld [vmem:[#allocation13 + $0x40] sm:$0xff]
    %v502 = vld [vmem:[#allocation13 + $0x48] sm:$0xff]
    %v503 = vld [vmem:[#allocation13 + $0x50] sm:$0xff]
    %v504 = vld [vmem:[#allocation13 + $0x58] sm:$0xff]
    %v505 = vld [vmem:[#allocation13 + $0x60] sm:$0xff]
    %v506 = vld [vmem:[#allocation13 + $0x68] sm:$0xff]
    %v507 = vld [vmem:[#allocation13 + $0x70] sm:$0xff]
    %v508 = vld [vmem:[#allocation13 + $0x78] sm:$0xff]
    %v509 = vld [vmem:[#allocation13 + $0x80] sm:$0xff]
    %v510 = vld [vmem:[#allocation13 + $0x88] sm:$0xff]
    %v511 = vld [vmem:[#allocation13 + $0x90] sm:$0xff]
    %v512 = vld [vmem:[#allocation13 + $0x98] sm:$0xff]
    %v513 = vld [vmem:[#allocation13 + $0xa0] sm:$0xff]
    %v514 = vld [vmem:[#allocation13 + $0xa8] sm:$0xff]
    %v515 = vld [vmem:[#allocation13 + $0xb0] sm:$0xff]
    %v516 = vld [vmem:[#allocation13 + $0xb8] sm:$0xff]
    %v517 = vld [vmem:[#allocation13 + $0xc0] sm:$0xff]
    %v518 = vld [vmem:[#allocation13 + $0xc8] sm:$0xff]
    %v519 = vld [vmem:[#allocation13 + $0xd0] sm:$0xff]
    %v520 = vld [vmem:[#allocation13 + $0xd8] sm:$0xff]
    %v521 = vld [vmem:[#allocation13 + $0xe0] sm:$0xff]
    %v522 = vld [vmem:[#allocation13 + $0xe8] sm:$0xff]
    %v523 = vld [vmem:[#allocation13 + $0xf0] sm:$0xff]
    %v524 = vld [vmem:[#allocation13 + $0xf8] sm:$0xff]
    %v525 = vld [vmem:[#allocation13 + $0x100] sm:$0xff]
    %v526 = vld [vmem:[#allocation13 + $0x108] sm:$0xff]
    %v527 = vld [vmem:[#allocation13 + $0x110] sm:$0xff]
    %v528 = vld [vmem:[#allocation13 + $0x118] sm:$0xff]
    %v529 = vld [vmem:[#allocation13 + $0x120] sm:$0xff]
    %v530 = vld [vmem:[#allocation13 + $0x128] sm:$0xff]
    %v531 = vld [vmem:[#allocation13 + $0x130] sm:$0xff]
    %v532 = vld [vmem:[#allocation13 + $0x138] sm:$0xff]
    %v533 = vld [vmem:[#allocation13 + $0x140] sm:$0xff]
    %v534 = vld [vmem:[#allocation13 + $0x148] sm:$0xff]
    %v535 = vld [vmem:[#allocation13 + $0x150] sm:$0xff]
    %v536 = vld [vmem:[#allocation13 + $0x158] sm:$0xff]
    %v537 = vld [vmem:[#allocation13 + $0x160] sm:$0xff]
    %v538 = vld [vmem:[#allocation13 + $0x168] sm:$0xff]
    %v539 = vld [vmem:[#allocation13 + $0x170] sm:$0xff]
    %v540 = vld [vmem:[#allocation13 + $0x178] sm:$0xff]
    %v541 = vld [vmem:[#allocation13 + $0x180] sm:$0xff]
    %v542 = vld [vmem:[#allocation13 + $0x188] sm:$0xff]
    %v543 = vld [vmem:[#allocation13 + $0x190] sm:$0xff]
    %v544 = vld [vmem:[#allocation13 + $0x198] sm:$0xff]
    %v545 = vld [vmem:[#allocation13 + $0x1a0] sm:$0xff]
    %v546 = vld [vmem:[#allocation13 + $0x1a8] sm:$0xff]
    %v547 = vld [vmem:[#allocation13 + $0x1b0] sm:$0xff]
    %v548 = vld [vmem:[#allocation13 + $0x1b8] sm:$0xff]
    %v549 = vld [vmem:[#allocation13 + $0x1c0] sm:$0xff]
    %v550 = vld [vmem:[#allocation13 + $0x1c8] sm:$0xff]
    %v551 = vld [vmem:[#allocation13 + $0x1d0] sm:$0xff]
    %v552 = vld [vmem:[#allocation13 + $0x1d8] sm:$0xff]
    %v553 = vld [vmem:[#allocation13 + $0x1e0] sm:$0xff]
    %v554 = vld [vmem:[#allocation13 + $0x1e8] sm:$0xff]
    %v555 = vld [vmem:[#allocation13 + $0x1f0] sm:$0xff]
    %v556 = vld [vmem:[#allocation13 + $0x1f8] sm:$0xff]
    %v557 = vld [vmem:[#allocation14] sm:$0xf]
    %v559 = vperm.slane %v557, 0
    %v560 = vperm.slane %v557, 1
    %v561 = vperm.slane %v557, 2
    %v562 = vperm.slane %v557, 3
    %v631 = vunpack.c.l.b16 %v493
    %v632 = vunpack.c.h.b16 %v493
    %v633 = vunpack.c.l.b16 %v494
    %v634 = vunpack.c.h.b16 %v494
    %v635 = vunpack.c.l.b16 %v495
    %v636 = vunpack.c.h.b16 %v495
    %v637 = vunpack.c.l.b16 %v496
    %v638 = vunpack.c.h.b16 %v496
    %v639 = vunpack.c.l.b16 %v497
    %v640 = vunpack.c.h.b16 %v497
    %v641 = vunpack.c.l.b16 %v498
    %v642 = vunpack.c.h.b16 %v498
    %v643 = vunpack.c.l.b16 %v499
    %v644 = vunpack.c.h.b16 %v499
    %v645 = vunpack.c.l.b16 %v500
    %v646 = vunpack.c.h.b16 %v500
    %v647 = vunpack.c.l.b16 %v501
    %v648 = vunpack.c.h.b16 %v501
    %v649 = vunpack.c.l.b16 %v502
    %v650 = vunpack.c.h.b16 %v502
    %v651 = vunpack.c.l.b16 %v503
    %v652 = vunpack.c.h.b16 %v503
    %v653 = vunpack.c.l.b16 %v504
    %v654 = vunpack.c.h.b16 %v504
    %v655 = vunpack.c.l.b16 %v505
    %v656 = vunpack.c.h.b16 %v505
    %v657 = vunpack.c.l.b16 %v506
    %v658 = vunpack.c.h.b16 %v506
    %v659 = vunpack.c.l.b16 %v507
    %v660 = vunpack.c.h.b16 %v507
    %v661 = vunpack.c.l.b16 %v508
    %v662 = vunpack.c.h.b16 %v508
    %v663 = vunpack.c.l.b16 %v509
    %v664 = vunpack.c.h.b16 %v509
    %v665 = vunpack.c.l.b16 %v510
    %v666 = vunpack.c.h.b16 %v510
    %v667 = vunpack.c.l.b16 %v511
    %v668 = vunpack.c.h.b16 %v511
    %v669 = vunpack.c.l.b16 %v512
    %v670 = vunpack.c.h.b16 %v512
    %v671 = vunpack.c.l.b16 %v513
    %v672 = vunpack.c.h.b16 %v513
    %v673 = vunpack.c.l.b16 %v514
    %v674 = vunpack.c.h.b16 %v514
    %v675 = vunpack.c.l.b16 %v515
    %v676 = vunpack.c.h.b16 %v515
    %v677 = vunpack.c.l.b16 %v516
    %v678 = vunpack.c.h.b16 %v516
    %v679 = vunpack.c.l.b16 %v517
    %v680 = vunpack.c.h.b16 %v517
    %v681 = vunpack.c.l.b16 %v518
    %v682 = vunpack.c.h.b16 %v518
    %v683 = vunpack.c.l.b16 %v519
    %v684 = vunpack.c.h.b16 %v519
    %v685 = vunpack.c.l.b16 %v520
    %v686 = vunpack.c.h.b16 %v520
    %v687 = vunpack.c.l.b16 %v521
    %v688 = vunpack.c.h.b16 %v521
    %v689 = vunpack.c.l.b16 %v522
    %v690 = vunpack.c.h.b16 %v522
    %v691 = vunpack.c.l.b16 %v523
    %v692 = vunpack.c.h.b16 %v523
    %v693 = vunpack.c.l.b16 %v524
    %v694 = vunpack.c.h.b16 %v524
    %v695 = vunpack.c.l.b16 %v525
    %v696 = vunpack.c.h.b16 %v525
    %v697 = vunpack.c.l.b16 %v526
    %v698 = vunpack.c.h.b16 %v526
    %v699 = vunpack.c.l.b16 %v527
    %v700 = vunpack.c.h.b16 %v527
    %v701 = vunpack.c.l.b16 %v528
    %v702 = vunpack.c.h.b16 %v528
    %v703 = vunpack.c.l.b16 %v529
    %v704 = vunpack.c.h.b16 %v529
    %v705 = vunpack.c.l.b16 %v530
    %v706 = vunpack.c.h.b16 %v530
    %v707 = vunpack.c.l.b16 %v531
    %v708 = vunpack.c.h.b16 %v531
    %v709 = vunpack.c.l.b16 %v532
    %v710 = vunpack.c.h.b16 %v532
    %v711 = vunpack.c.l.b16 %v533
    %v712 = vunpack.c.h.b16 %v533
    %v713 = vunpack.c.l.b16 %v534
    %v714 = vunpack.c.h.b16 %v534
    %v715 = vunpack.c.l.b16 %v535
    %v716 = vunpack.c.h.b16 %v535
    %v717 = vunpack.c.l.b16 %v536
    %v718 = vunpack.c.h.b16 %v536
    %v719 = vunpack.c.l.b16 %v537
    %v720 = vunpack.c.h.b16 %v537
    %v721 = vunpack.c.l.b16 %v538
    %v722 = vunpack.c.h.b16 %v538
    %v723 = vunpack.c.l.b16 %v539
    %v724 = vunpack.c.h.b16 %v539
    %v725 = vunpack.c.l.b16 %v540
    %v726 = vunpack.c.h.b16 %v540
    %v727 = vunpack.c.l.b16 %v541
    %v728 = vunpack.c.h.b16 %v541
    %v729 = vunpack.c.l.b16 %v542
    %v730 = vunpack.c.h.b16 %v542
    %v731 = vunpack.c.l.b16 %v543
    %v732 = vunpack.c.h.b16 %v543
    %v733 = vunpack.c.l.b16 %v544
    %v734 = vunpack.c.h.b16 %v544
    %v735 = vunpack.c.l.b16 %v545
    %v736 = vunpack.c.h.b16 %v545
    %v737 = vunpack.c.l.b16 %v546
    %v738 = vunpack.c.h.b16 %v546
    %v739 = vunpack.c.l.b16 %v547
    %v740 = vunpack.c.h.b16 %v547
    %v741 = vunpack.c.l.b16 %v548
    %v742 = vunpack.c.h.b16 %v548
    %v743 = vunpack.c.l.b16 %v549
    %v744 = vunpack.c.h.b16 %v549
    %v745 = vunpack.c.l.b16 %v550
    %v746 = vunpack.c.h.b16 %v550
    %v747 = vunpack.c.l.b16 %v551
    %v748 = vunpack.c.h.b16 %v551
    %v749 = vunpack.c.l.b16 %v552
    %v750 = vunpack.c.h.b16 %v552
    %v751 = vunpack.c.l.b16 %v553
    %v752 = vunpack.c.h.b16 %v553
    %v753 = vunpack.c.l.b16 %v554
    %v754 = vunpack.c.h.b16 %v554
    %v755 = vunpack.c.l.b16 %v555
    %v756 = vunpack.c.h.b16 %v555
    %v757 = vunpack.c.l.b16 %v556
    %v758 = vunpack.c.h.b16 %v556
    %v759 = vpack.c.b16 %v635, %v631
    %v760 = vpack.c.b16 %v636, %v632
    %v761 = vpack.c.b16 %v637, %v633
    %v762 = vpack.c.b16 %v638, %v634
    %v763 = vpack.c.b16 %v643, %v639
    %v764 = vpack.c.b16 %v644, %v640
    %v765 = vpack.c.b16 %v645, %v641
    %v766 = vpack.c.b16 %v646, %v642
    %v767 = vpack.c.b16 %v651, %v647
    %v768 = vpack.c.b16 %v652, %v648
    %v769 = vpack.c.b16 %v653, %v649
    %v770 = vpack.c.b16 %v654, %v650
    %v771 = vpack.c.b16 %v659, %v655
    %v772 = vpack.c.b16 %v660, %v656
    %v773 = vpack.c.b16 %v661, %v657
    %v774 = vpack.c.b16 %v662, %v658
    %v775 = vpack.c.b16 %v667, %v663
    %v776 = vpack.c.b16 %v668, %v664
    %v777 = vpack.c.b16 %v669, %v665
    %v778 = vpack.c.b16 %v670, %v666
    %v779 = vpack.c.b16 %v675, %v671
    %v780 = vpack.c.b16 %v676, %v672
    %v781 = vpack.c.b16 %v677, %v673
    %v782 = vpack.c.b16 %v678, %v674
    %v783 = vpack.c.b16 %v683, %v679
    %v784 = vpack.c.b16 %v684, %v680
    %v785 = vpack.c.b16 %v685, %v681
    %v786 = vpack.c.b16 %v686, %v682
    %v787 = vpack.c.b16 %v691, %v687
    %v788 = vpack.c.b16 %v692, %v688
    %v789 = vpack.c.b16 %v693, %v689
    %v790 = vpack.c.b16 %v694, %v690
    %v791 = vpack.c.b16 %v699, %v695
    %v792 = vpack.c.b16 %v700, %v696
    %v793 = vpack.c.b16 %v701, %v697
    %v794 = vpack.c.b16 %v702, %v698
    %v795 = vpack.c.b16 %v707, %v703
    %v796 = vpack.c.b16 %v708, %v704
    %v797 = vpack.c.b16 %v709, %v705
    %v798 = vpack.c.b16 %v710, %v706
    %v799 = vpack.c.b16 %v715, %v711
    %v800 = vpack.c.b16 %v716, %v712
    %v801 = vpack.c.b16 %v717, %v713
    %v802 = vpack.c.b16 %v718, %v714
    %v803 = vpack.c.b16 %v723, %v719
    %v804 = vpack.c.b16 %v724, %v720
    %v805 = vpack.c.b16 %v725, %v721
    %v806 = vpack.c.b16 %v726, %v722
    %v807 = vpack.c.b16 %v731, %v727
    %v808 = vpack.c.b16 %v732, %v728
    %v809 = vpack.c.b16 %v733, %v729
    %v810 = vpack.c.b16 %v734, %v730
    %v811 = vpack.c.b16 %v739, %v735
    %v812 = vpack.c.b16 %v740, %v736
    %v813 = vpack.c.b16 %v741, %v737
    %v814 = vpack.c.b16 %v742, %v738
    %v815 = vpack.c.b16 %v747, %v743
    %v816 = vpack.c.b16 %v748, %v744
    %v817 = vpack.c.b16 %v749, %v745
    %v818 = vpack.c.b16 %v750, %v746
    %v819 = vpack.c.b16 %v755, %v751
    %v820 = vpack.c.b16 %v756, %v752
    %v821 = vpack.c.b16 %v757, %v753
    %v822 = vpack.c.b16 %v758, %v754
    %887 = vmatpush.bf16.msra.mxu0 %v787
    %888 = vmatpush.bf16.msra.mxu0 %v783
    %889 = vmatpush.bf16.msra.mxu0 %v779
    %890 = vmatpush.bf16.msra.mxu0 %v775
    %891 = vmatpush.bf16.msra.mxu0 %v771
    %892 = vmatpush.bf16.msra.mxu0 %v767
    %893 = vmatpush.bf16.msra.mxu0 %v763
    %894 = vmatpush.bf16.msra.mxu0 %v759
    %895 = vmatmul.bf16.gmra.mxu0 %v491
    %v896 = vpop.f32.mrf.mxu0
    %v897 = vadd.f32 %v559, %v896
    %v898 = vpop.f32.mrf.mxu0
    %899 = vdwg.mxu0
    %900 = vmatpush.bf16.msra.mxu0 %v819
    %901 = vmatpush.bf16.msra.mxu0 %v815
    %902 = vmatpush.bf16.msra.mxu0 %v811
    %903 = vmatpush.bf16.msra.mxu0 %v807
    %904 = vmatpush.bf16.msra.mxu0 %v803
    %905 = vmatpush.bf16.msra.mxu0 %v799
    %906 = vmatpush.bf16.msra.mxu0 %v795
    %907 = vmatpush.bf16.msra.mxu0 %v791
    %908 = vmatmul.bf16.gmra.mxu0 %v492
    %v909 = vpop.f32.mrf.mxu0
    %v910 = vadd.f32 %v897, %v909
    %v911 = vpop.f32.mrf.mxu0
    %912 = vdwg.mxu0
    %913 = vmatpush.bf16.msra.mxu0 %v788
    %914 = vmatpush.bf16.msra.mxu0 %v784
    %915 = vmatpush.bf16.msra.mxu0 %v780
    %916 = vmatpush.bf16.msra.mxu0 %v776
    %917 = vmatpush.bf16.msra.mxu0 %v772
    %918 = vmatpush.bf16.msra.mxu0 %v768
    %919 = vmatpush.bf16.msra.mxu0 %v764
    %920 = vmatpush.bf16.msra.mxu0 %v760
    %921 = vmatmul.bf16.gmra.mxu0 %v491
    %v922 = vpop.f32.mrf.mxu0
    %v923 = vadd.f32 %v560, %v922
    %v924 = vpop.f32.mrf.mxu0
    %925 = vdwg.mxu0
    %926 = vmatpush.bf16.msra.mxu0 %v820
    %927 = vmatpush.bf16.msra.mxu0 %v816
    %928 = vmatpush.bf16.msra.mxu0 %v812
    %929 = vmatpush.bf16.msra.mxu0 %v808
    %930 = vmatpush.bf16.msra.mxu0 %v804
    %931 = vmatpush.bf16.msra.mxu0 %v800
    %932 = vmatpush.bf16.msra.mxu0 %v796
    %933 = vmatpush.bf16.msra.mxu0 %v792
    %934 = vmatmul.bf16.gmra.mxu0 %v492
    %v935 = vpop.f32.mrf.mxu0
    %v936 = vadd.f32 %v923, %v935
    %v937 = vpop.f32.mrf.mxu0
    %938 = vdwg.mxu0
    %939 = vmatpush.bf16.msra.mxu0 %v789
    %940 = vmatpush.bf16.msra.mxu0 %v785
    %941 = vmatpush.bf16.msra.mxu0 %v781
    %942 = vmatpush.bf16.msra.mxu0 %v777
    %943 = vmatpush.bf16.msra.mxu0 %v773
    %944 = vmatpush.bf16.msra.mxu0 %v769
    %945 = vmatpush.bf16.msra.mxu0 %v765
    %946 = vmatpush.bf16.msra.mxu0 %v761
    %947 = vmatmul.bf16.gmra.mxu0 %v491
    %v948 = vpop.f32.mrf.mxu0
    %v949 = vadd.f32 %v561, %v948
    %v950 = vpop.f32.mrf.mxu0
    %951 = vdwg.mxu0
    %952 = vmatpush.bf16.msra.mxu0 %v821
    %953 = vmatpush.bf16.msra.mxu0 %v817
    %954 = vmatpush.bf16.msra.mxu0 %v813
    %955 = vmatpush.bf16.msra.mxu0 %v809
    %956 = vmatpush.bf16.msra.mxu0 %v805
    %957 = vmatpush.bf16.msra.mxu0 %v801
    %958 = vmatpush.bf16.msra.mxu0 %v797
    %959 = vmatpush.bf16.msra.mxu0 %v793
    %960 = vmatmul.bf16.gmra.mxu0 %v492
    %v961 = vpop.f32.mrf.mxu0
    %v962 = vadd.f32 %v949, %v961
    %v963 = vpop.f32.mrf.mxu0
    %964 = vdwg.mxu0
    %965 = vmatpush.bf16.msra.mxu0 %v790
    %966 = vmatpush.bf16.msra.mxu0 %v786
    %967 = vmatpush.bf16.msra.mxu0 %v782
    %968 = vmatpush.bf16.msra.mxu0 %v778
    %969 = vmatpush.bf16.msra.mxu0 %v774
    %970 = vmatpush.bf16.msra.mxu0 %v770
    %971 = vmatpush.bf16.msra.mxu0 %v766
    %972 = vmatpush.bf16.msra.mxu0 %v762
    %973 = vmatmul.bf16.gmra.mxu0 %v491
    %v974 = vpop.f32.mrf.mxu0
    %v975 = vadd.f32 %v562, %v974
    %v976 = vpop.f32.mrf.mxu0
    %977 = vdwg.mxu0
    %978 = vmatpush.bf16.msra.mxu0 %v822
    %979 = vmatpush.bf16.msra.mxu0 %v818
    %980 = vmatpush.bf16.msra.mxu0 %v814
    %981 = vmatpush.bf16.msra.mxu0 %v810
    %982 = vmatpush.bf16.msra.mxu0 %v806
    %983 = vmatpush.bf16.msra.mxu0 %v802
    %984 = vmatpush.bf16.msra.mxu0 %v798
    %985 = vmatpush.bf16.msra.mxu0 %v794
    %986 = vmatmul.bf16.gmra.mxu0 %v492
    %v987 = vpop.f32.mrf.mxu0
    %v988 = vadd.f32 %v975, %v987
    %v989 = vpop.f32.mrf.mxu0
    %990 = vdwg.mxu0
    %991 = vst [vmem:[%s13] sm:$0xff] %v910
    %992 = vst [vmem:[%s13 + $0x8] sm:$0xff] %v936
    %993 = vst [vmem:[%s13 + $0x10] sm:$0xff] %v962
    %994 = vst [vmem:[%s13 + $0x18] sm:$0xff] %v988
    %v995 = vrot.slane %v962, 4
    %vm996 = vcmask 1047556
    %v997 = vsel %vm996, %v995, %v910
    %v998 = vrot.slane %v910, 4
    %v999 = vsel %vm996, %v962, %v998
    %v1001 = vunpack.c.l.s4 1983009808
    %v1002 = vunpack.c.0.s8 %v1001
    %v1003 = vperm.slane %v997, %v1002
    %v1005 = vunpack.c.l.s4 1983009808
    %v1006 = vunpack.c.0.s8 %v1005
    %v1007 = vperm.slane %v999, %v1006
    %v1008 = vrot.slane %v988, 4
    %v1009 = vsel %vm996, %v1008, %v936
    %v1010 = vrot.slane %v936, 4
    %v1011 = vsel %vm996, %v988, %v1010
    %v1013 = vunpack.c.l.s4 1983009808
    %v1014 = vunpack.c.0.s8 %v1013
    %v1015 = vperm.slane %v1009, %v1014
    %v1017 = vunpack.c.l.s4 1983009808
    %v1018 = vunpack.c.0.s8 %v1017
    %v1019 = vperm.slane %v1011, %v1018
    %v1020 = vrot.slane %v1015, 4
    %v1021 = vsel %vm996, %v1020, %v1003
    %v1022 = vrot.slane %v1003, 4
    %v1023 = vsel %vm996, %v1015, %v1022
    %v1025 = vunpack.c.l.s4 1934713408
    %v1026 = vunpack.c.0.s8 %v1025
    %v1027 = vperm.slane %v1021, %v1026
    %v1029 = vunpack.c.l.s4 1934713408
    %v1030 = vunpack.c.0.s8 %v1029
    %v1031 = vperm.slane %v1023, %v1030
    %v1032 = vrot.slane %v1019, 4
    %v1033 = vsel %vm996, %v1032, %v1007
    %v1034 = vrot.slane %v1007, 4
    %v1035 = vsel %vm996, %v1019, %v1034
    %v1037 = vunpack.c.l.s4 1934713408
    %v1038 = vunpack.c.0.s8 %v1037
    %v1039 = vperm.slane %v1033, %v1038
    %v1041 = vunpack.c.l.s4 1934713408
    %v1042 = vunpack.c.0.s8 %v1041
    %v1043 = vperm.slane %v1035, %v1042
    %v1044 = vrot.slane %v1027, 4
    %v1045 = vsel %vm996, 0.0, %v1044
    %v1046 = vrot.slane %v1031, 4
    %v1047 = vsel %vm996, 0.0, %v1046
    %v1048 = vrot.slane %v1039, 4
    %v1049 = vsel %vm996, 0.0, %v1048
    %v1050 = vrot.slane %v1043, 4
    %v1051 = vsel %vm996, 0.0, %v1050
    %v1052 = vld [vmem:[%s2] sm:$0xff]
    %v1054 = vrot.slane %v1052, 1
    %v1055 = vrot.slane %v1052, 2
    %v1056 = vrot.slane %v1052, 3
    %v1057 = vrot.slane %v1052, 4
    %v1058 = vrot.slane %v1052, 5
    %v1059 = vrot.slane %v1052, 6
    %v1060 = vrot.slane %v1052, 7
    %v1061 = vperm.slane %v1052, 0
    %v1062 = vperm.slane %v1054, 0
    %v1063 = vperm.slane %v1055, 0
    %v1064 = vperm.slane %v1056, 0
    %v1065 = vperm.slane %v1057, 0
    %v1066 = vperm.slane %v1058, 0
    %v1067 = vperm.slane %v1059, 0
    %v1068 = vperm.slane %v1060, 0
    %v1077 = vmul.f32 %v1027, %v1061
    %v1078 = vmul.f32 %v1045, %v1062
    %v1079 = vmul.f32 %v1031, %v1063
    %v1080 = vmul.f32 %v1047, %v1064
    %v1081 = vmul.f32 %v1039, %v1065
    %v1082 = vmul.f32 %v1049, %v1066
    %v1083 = vmul.f32 %v1043, %v1067
    %v1084 = vmul.f32 %v1051, %v1068
    %vm1085 = vcmask 1043456
    %v1086 = vsel %vm1085, %v1077, 0.0
    %1087 = vadd.xlane.f32.xlu0 %v1086
    %v1088 = vpop.xlane.xlu0 %1087
    %v1089 = vsel %vm1085, %v1078, 0.0
    %1090 = vadd.xlane.f32.xlu0 %v1089
    %v1091 = vpop.xlane.xlu0 %1090
    %v1092 = vsel %vm1085, %v1079, 0.0
    %1093 = vadd.xlane.f32.xlu0 %v1092
    %v1094 = vpop.xlane.xlu0 %1093
    %v1095 = vsel %vm1085, %v1080, 0.0
    %1096 = vadd.xlane.f32.xlu0 %v1095
    %v1097 = vpop.xlane.xlu0 %1096
    %v1098 = vsel %vm1085, %v1081, 0.0
    %1099 = vadd.xlane.f32.xlu0 %v1098
    %v1100 = vpop.xlane.xlu0 %1099
    %v1101 = vsel %vm1085, %v1082, 0.0
    %1102 = vadd.xlane.f32.xlu0 %v1101
    %v1103 = vpop.xlane.xlu0 %1102
    %v1104 = vsel %vm1085, %v1083, 0.0
    %1105 = vadd.xlane.f32.xlu0 %v1104
    %v1106 = vpop.xlane.xlu0 %1105
    %v1107 = vsel %vm1085, %v1084, 0.0
    %1108 = vadd.xlane.f32.xlu0 %v1107
    %v1109 = vpop.xlane.xlu0 %1108
    %v1118 = vlaneseq
    %v1119 = vand.u32 %v1118, 127
    %v1120 = vperm.slane %v1088, %v1119
    %v1121 = vperm.slane %v1091, %v1119
    %v1122 = vperm.slane %v1094, %v1119
    %v1123 = vperm.slane %v1097, %v1119
    %v1124 = vperm.slane %v1100, %v1119
    %v1125 = vperm.slane %v1103, %v1119
    %v1126 = vperm.slane %v1106, %v1119
    %v1127 = vperm.slane %v1109, %v1119
    %vm1128 = vcmask 1041409
    %v1129 = vsel %vm1128, %v1121, %v1120
    %vm1130 = vcmask 1042434
    %v1131 = vsel %vm1130, %v1122, %v1129
    %vm1132 = vcmask 1043459
    %v1133 = vsel %vm1132, %v1123, %v1131
    %vm1134 = vcmask 1044484
    %v1135 = vsel %vm1134, %v1124, %v1133
    %vm1136 = vcmask 1045509
    %v1137 = vsel %vm1136, %v1125, %v1135
    %vm1138 = vcmask 1046534
    %v1139 = vsel %vm1138, %v1126, %v1137
    %vm1140 = vcmask 1047559
    %v1141 = vsel %vm1140, %v1127, %v1139
    %vm1143 = vcmask 31744
    %1144 = vst.msk [vmem:[%s12] sm:$0xff] %vm1143, %v1141
    // Predicated region
    $region82: #{usf_forward.1} parent=1 // pred_check
      _
    $region83: #{usf_forward.1} parent=1 // pred_check_branch
      %1146 = sbr.rel (0) target = $region85
    $region84: #{usf_forward.1} parent=1 // pred_region
      _
    $region85: #{usf_forward.1} parent=1 // pred_fallthru
      _
    // Predicated region
    $region86: #{usf_forward.1} parent=1 // pred_check
      _
    $region87: #{usf_forward.1} parent=1 // pred_check_branch
      %1148 = sbr.rel (0) target = $region89
    $region88: #{usf_forward.1} parent=1 // pred_region
      _
    $region89: #{usf_forward.1} parent=1 // pred_fallthru
      _
    // Predicated region
    $region90: #{usf_forward.1} parent=1 // pred_check
      _
    $region91: #{usf_forward.1} parent=1 // pred_check_branch
      %1150 = sbr.rel (0) target = $region93
    $region92: #{usf_forward.1} parent=1 // pred_region
      %1152 = vsyncadd [#allocation4], 0
      %s1154 = sshll.u32 [#allocation16], 4
      %s1155 = int_to_ptr.vmem [resolvable:$true] %s1154
      %s1156 = sshll.u32 %s14, 4
      %s1157 = int_to_ptr.hbm [resolvable:$true] %s1156
      %1159 = dma.vmem_to_hbm [thread:$0]  %s1155, 128, %s1157, [#allocation4]
    $region93: #{usf_forward.1} parent=1 // pred_fallthru
      _
    // Predicated region
    $region94: #{usf_forward.1} parent=1 // pred_check
      _
    $region95: #{usf_forward.1} parent=1 // pred_check_branch
      %1161 = sbr.rel (0) target = $region97
    $region96: #{usf_forward.1} parent=1 // pred_region
      _
    $region97: #{usf_forward.1} parent=1 // pred_fallthru
      _
    // Predicated region
    $region98: #{usf_forward.1} parent=1 // pred_check
      _
    $region99: #{usf_forward.1} parent=1 // pred_check_branch
      %1163 = sbr.rel (0) target = $region101
    $region100: #{usf_forward.1} parent=1 // pred_region
      _
    $region101: #{usf_forward.1} parent=1 // pred_fallthru
      _
    // Predicated region
    $region102: #{usf_forward.1} parent=1 // pred_check
      _
    $region103: #{usf_forward.1} parent=1 // pred_check_branch
      %1165 = sbr.rel (0) target = $region105
    $region104: #{usf_forward.1} parent=1 // pred_region
      %1167 = dma.done [#allocation4], 128
    $region105: #{usf_forward.1} parent=1 // pred_fallthru
      _
    %1168 = vsyncpa [#allocation3], 1
    %1169 = vsyncpa [#allocation6], 1
    %1170 = vsyncpa [#allocation9], 1
    %1171 = vsyncpa [#allocation12], 1
    %1172 = vsyncpa [#allocation15], 1
    %1173 = vsyncpa [#allocation4], 1

</llo_original>
